<compile_context>
chip_gen: v7x
topology: tpu7x:2x2x1
jax: 0.10.0
libtpu: 0.0.40
codegen_flags: <defaults>
</compile_context>

<pallas_src>
import functools

import jax
import jax.numpy as jnp
import numpy as np
from jax import lax
from jax.experimental import pallas as pl
from jax.experimental.pallas import tpu as pltpu

LN_EPS = 1e-5


def _decoder_res_cat_kernel(x_ref, w1cat_ref, b1_ref, g_ref, beta_ref,
                            w2h_ref, b2_ref, o_ref, *, hidden_size, mm_dtype):
    # x tile: (tm, in_features), in the matmul dtype (bf16 fast path or f32).
    x = x_ref[...]

    # Single fused MXU pass over x: columns [0, hidden) are the MLP
    # pre-activation, columns [hidden, hidden+out) are x @ W2[:, :in]^T.
    xcat = jnp.dot(x, w1cat_ref[...], preferred_element_type=jnp.float32)
    h_pre = xcat[:, :hidden_size] + b1_ref[...]       # (tm, hidden)  f32
    x_res = xcat[:, hidden_size:]                     # (tm, out)     f32

    # LayerNorm + ReLU in f32 on the VPU/XLU.
    mu = jnp.mean(h_pre, axis=-1, keepdims=True)
    var = jnp.mean(jnp.square(h_pre - mu), axis=-1, keepdims=True)
    h = (h_pre - mu) * lax.rsqrt(var + LN_EPS)
    h = h * g_ref[...] + beta_ref[...]
    h = jnp.maximum(h, 0.0)

    # Second MXU pass: mlp_out @ W2[:, in:]^T, then add residual path + bias.
    out = (x_res
           + jnp.dot(h.astype(mm_dtype), w2h_ref[...],
                     preferred_element_type=jnp.float32)
           + b2_ref[...])
    # NOTE(v5e): out_features=60 < 128 lanes -> masked vst. If profiling shows
    # the store slot saturated, pad out_features to 128 wrapper-side and slice.
    o_ref[...] = out.astype(o_ref.dtype)


@functools.partial(jax.jit, static_argnames=("tm", "matmul_dtype"))
def decoder_res_cat(hidden_states, params, *, tm=None, matmul_dtype=jnp.bfloat16):
    """hidden_states: (..., in_features) feature-last. Returns (..., out_features)."""
    w1, b1, gamma, beta, w2, b2 = (params["w1"], params["b1"], params["gamma"],
                                   params["beta"], params["w2"], params["b2"])
    in_features = w1.shape[0]
    hidden_size = w1.shape[1]
    out_features = w2.shape[0]

    lead = hidden_states.shape[:-1]
    x2d = hidden_states.reshape(-1, in_features)
    n_rows = x2d.shape[0]

    # --- Row-tile selection -------------------------------------------------
    # Big tiles amortize the ~0.35 us/step pipeline overhead; per-tile VMEM is
    # tiny (< a few hundred KiB at tm=1024), so even v7x's 64 MiB is ample.
    # Cap tm so there are >= 2 grid steps: the "parallel" grid axis is how work
    # is sharded across v7x's two TensorCores (no-op on v5e/v6e).
    if tm is None:
        tm = min(1024, max(8, pl.cdiv(n_rows, 2)))
    tm = max(8, ((int(tm) + 7) // 8) * 8)     # sublane-aligned block rows

    n_pad = pl.cdiv(n_rows, tm) * tm
    if n_pad != n_rows:
        x2d = jnp.pad(x2d, ((0, n_pad - n_rows), (0, 0)))

    # --- Weight prep (plain JAX glue; constant-folded under jit) ------------
    mm_dtype = matmul_dtype
    w2x = jnp.transpose(w2[:, :in_features])          # (in, out)
    w2h = jnp.transpose(w2[:, in_features:])          # (hidden, out)
    w1cat = jnp.concatenate([w1, w2x], axis=1).astype(mm_dtype)  # (in, hidden+out)
    w2h = w2h.astype(mm_dtype)
    x2d = x2d.astype(mm_dtype)                        # halves the HBM read in bf16 mode
    b1_2d = b1.reshape(1, hidden_size).astype(jnp.float32)
    g_2d = gamma.reshape(1, hidden_size).astype(jnp.float32)
    be_2d = beta.reshape(1, hidden_size).astype(jnp.float32)
    b2_2d = b2.reshape(1, out_features).astype(jnp.float32)

    grid = (n_pad // tm,)
    full = lambda i: (0, 0)

    kernel = functools.partial(_decoder_res_cat_kernel,
                               hidden_size=hidden_size, mm_dtype=mm_dtype)

    out2d = pl.pallas_call(
        kernel,
        out_shape=jax.ShapeDtypeStruct((n_pad, out_features), hidden_states.dtype),
        grid_spec=pltpu.PrefetchScalarGridSpec(
            num_scalar_prefetch=0,
            grid=grid,
            in_specs=[
                pl.BlockSpec((tm, in_features), lambda i: (i, 0)),             # x rows
                pl.BlockSpec((in_features, hidden_size + out_features), full),  # [W1^T | W2x]
                pl.BlockSpec((1, hidden_size), full),                          # b1
                pl.BlockSpec((1, hidden_size), full),                          # ln gamma
                pl.BlockSpec((1, hidden_size), full),                          # ln beta
                pl.BlockSpec((hidden_size, out_features), full),               # W2[:, in:]^T
                pl.BlockSpec((1, out_features), full),                         # b2
            ],
            out_specs=pl.BlockSpec((tm, out_features), lambda i: (i, 0)),
        ),
        compiler_params=pltpu.CompilerParams(
            dimension_semantics=("parallel",)),
    )(x2d, w1cat, b1_2d, g_2d, be_2d, w2h, b2_2d)

    if n_pad != n_rows:
        out2d = out2d[:n_rows]
    return out2d.reshape(*lead, out_features)


def init_params(key, hidden_size, in_features, out_features=60, dtype=jnp.float32):
    k1, k2, k3, k4 = jax.random.split(key, 4)
    # Deterministic synthetic init (not a checkpoint load).
    w1 = (jax.random.normal(k1, (in_features, hidden_size), dtype)
          * (1.0 / np.sqrt(in_features)))                     # stored as W1^T
    b1 = jax.random.normal(k2, (hidden_size,), dtype) * 0.01
    gamma = jnp.ones((hidden_size,), dtype)
    beta = jnp.zeros((hidden_size,), dtype)
    w2 = (jax.random.normal(k3, (out_features, hidden_size + in_features), dtype)
          * (1.0 / np.sqrt(hidden_size + in_features)))       # PyTorch layout (out, in)
    b2 = jax.random.normal(k4, (out_features,), dtype) * 0.01
    return dict(w1=w1, b1=b1, gamma=gamma, beta=beta, w2=w2, b2=b2)


def reference(hidden_states, params):
    """Pure-JAX reference mirroring the PyTorch forward exactly (f32)."""
    x = hidden_states.astype(jnp.float32)
    h = x @ params["w1"] + params["b1"]
    mu = jnp.mean(h, axis=-1, keepdims=True)
    var = jnp.mean(jnp.square(h - mu), axis=-1, keepdims=True)
    h = (h - mu) / jnp.sqrt(var + LN_EPS)
    h = h * params["gamma"] + params["beta"]
    h = jnp.maximum(h, 0.0)
    cat = jnp.concatenate([x, h], axis=-1)
    return cat @ params["w2"].T + params["b2"]


if __name__ == "__main__":
    key = jax.random.PRNGKey(0)
    kx1, kx2, kp = jax.random.split(key, 3)

    in_features, hidden_size, out_features = 32, 64, 60
    params = init_params(kp, hidden_size, in_features, out_features)

    # Shape 1: row count divides the tile. Shape 2: ragged rows -> padding path.
    hs1 = jax.random.normal(kx1, (2, 64, in_features), jnp.float32)
    hs2 = jax.random.normal(kx2, (3, 50, in_features), jnp.float32)

    for hs in (hs1, hs2):
        ref = np.asarray(reference(hs, params))

        # f32 matmul mode: bit-accurate check against the PyTorch-equivalent ref.
        out_f32 = jax.block_until_ready(
            decoder_res_cat(hs, params, matmul_dtype=jnp.float32))
        np.testing.assert_allclose(np.asarray(out_f32), ref, rtol=1e-5, atol=1e-5)

        # bf16 matmul mode (default fast path for the HBM-bound regime).
        out_bf16 = jax.block_until_ready(decoder_res_cat(hs, params))
        np.testing.assert_allclose(np.asarray(out_bf16), ref, rtol=5e-2, atol=5e-2)

        assert out_bf16.shape == hs.shape[:-1] + (out_features,)

    print("KERNEL_OK")
</pallas_src>

<mosaic_0001>
module attributes {stable_mosaic.version = 11 : i64} {
  func.func @_decoder_res_cat_kernel(%arg0: i32, %arg1: memref<64x32xf32, #tpu.memory_space<vmem>>, %arg2: memref<32x124xf32, #tpu.memory_space<vmem>>, %arg3: memref<1x64xf32, #tpu.memory_space<vmem>>, %arg4: memref<1x64xf32, #tpu.memory_space<vmem>>, %arg5: memref<1x64xf32, #tpu.memory_space<vmem>>, %arg6: memref<64x60xf32, #tpu.memory_space<vmem>>, %arg7: memref<1x60xf32, #tpu.memory_space<vmem>>, %arg8: memref<64x60xf32, #tpu.memory_space<vmem>>) attributes {dimension_semantics = [#tpu.dimension_semantics<parallel>], iteration_bounds = array<i64: 2>, scalar_prefetch = 0 : i64, scratch_operands = 0 : i64, tpu.core_type = #tpu.core_type<tc>, window_params = [{transform_indices = @transform_0, window_bounds = array<i64: 64, 32>}, {pipeline_mode = #tpu.pipeline_mode<synchronous>, transform_indices = @transform_1, window_bounds = array<i64: 32, 124>}, {pipeline_mode = #tpu.pipeline_mode<synchronous>, transform_indices = @transform_2, window_bounds = array<i64: 1, 64>}, {pipeline_mode = #tpu.pipeline_mode<synchronous>, transform_indices = @transform_3, window_bounds = array<i64: 1, 64>}, {pipeline_mode = #tpu.pipeline_mode<synchronous>, transform_indices = @transform_4, window_bounds = array<i64: 1, 64>}, {pipeline_mode = #tpu.pipeline_mode<synchronous>, transform_indices = @transform_5, window_bounds = array<i64: 64, 60>}, {pipeline_mode = #tpu.pipeline_mode<synchronous>, transform_indices = @transform_6, window_bounds = array<i64: 1, 60>}, {transform_indices = @transform_7, window_bounds = array<i64: 64, 60>}]} {
    %c0 = arith.constant 0 : index
    %c0_0 = arith.constant 0 : index
    %0 = vector.load %arg1[%c0, %c0_0] : memref<64x32xf32, #tpu.memory_space<vmem>>, vector<64x32xf32>
    %c0_1 = arith.constant 0 : index
    %c0_2 = arith.constant 0 : index
    %1 = vector.load %arg2[%c0_1, %c0_2] : memref<32x124xf32, #tpu.memory_space<vmem>>, vector<32x124xf32>
    %cst = arith.constant dense<0.000000e+00> : vector<64x124xf32>
    %2 = tpu.matmul %0, %1, %cst {dimension_numbers = #tpu.dot_dimension_numbers<[1], [0], [0], [1], [0, 0, 1, 1], [], []>} : vector<64x32xf32>, vector<32x124xf32>, vector<64x124xf32> -> vector<64x124xf32>
    %3 = vector.extract_strided_slice %2 {offsets = [0, 0], sizes = [64, 64], strides = [1, 1]} : vector<64x124xf32> to vector<64x64xf32>
    %c0_3 = arith.constant 0 : index
    %c0_4 = arith.constant 0 : index
    %4 = vector.load %arg3[%c0_3, %c0_4] : memref<1x64xf32, #tpu.memory_space<vmem>>, vector<1x64xf32>
    %5 = vector.broadcast %4 : vector<1x64xf32> to vector<64x64xf32>
    %6 = arith.addf %3, %5 : vector<64x64xf32>
    %7 = vector.extract_strided_slice %2 {offsets = [0, 64], sizes = [64, 60], strides = [1, 1]} : vector<64x124xf32> to vector<64x60xf32>
    %cst_5 = arith.constant dense<0.000000e+00> : vector<64xf32>
    %8 = vector.multi_reduction <add>, %6, %cst_5 [1] : vector<64x64xf32> to vector<64xf32>
    %9 = vector.shape_cast %8 : vector<64xf32> to vector<64x1xf32>
    %cst_6 = arith.constant 6.400000e+01 : f32
    %10 = vector.broadcast %cst_6 : f32 to vector<64x1xf32>
    %11 = arith.divf %9, %10 : vector<64x1xf32>
    %12 = vector.broadcast %11 : vector<64x1xf32> to vector<64x64xf32>
    %13 = arith.subf %6, %12 : vector<64x64xf32>
    %14 = arith.mulf %13, %13 : vector<64x64xf32>
    %cst_7 = arith.constant dense<0.000000e+00> : vector<64xf32>
    %15 = vector.multi_reduction <add>, %14, %cst_7 [1] : vector<64x64xf32> to vector<64xf32>
    %16 = vector.shape_cast %15 : vector<64xf32> to vector<64x1xf32>
    %cst_8 = arith.constant 6.400000e+01 : f32
    %17 = vector.broadcast %cst_8 : f32 to vector<64x1xf32>
    %18 = arith.divf %16, %17 : vector<64x1xf32>
    %19 = vector.broadcast %11 : vector<64x1xf32> to vector<64x64xf32>
    %20 = arith.subf %6, %19 : vector<64x64xf32>
    %cst_9 = arith.constant 9.99999974E-6 : f32
    %21 = vector.broadcast %cst_9 : f32 to vector<64x1xf32>
    %22 = arith.addf %18, %21 : vector<64x1xf32>
    %23 = math.rsqrt %22 : vector<64x1xf32>
    %24 = vector.broadcast %23 : vector<64x1xf32> to vector<64x64xf32>
    %25 = arith.mulf %20, %24 : vector<64x64xf32>
    %c0_10 = arith.constant 0 : index
    %c0_11 = arith.constant 0 : index
    %26 = vector.load %arg4[%c0_10, %c0_11] : memref<1x64xf32, #tpu.memory_space<vmem>>, vector<1x64xf32>
    %27 = vector.broadcast %26 : vector<1x64xf32> to vector<64x64xf32>
    %28 = arith.mulf %25, %27 : vector<64x64xf32>
    %c0_12 = arith.constant 0 : index
    %c0_13 = arith.constant 0 : index
    %29 = vector.load %arg5[%c0_12, %c0_13] : memref<1x64xf32, #tpu.memory_space<vmem>>, vector<1x64xf32>
    %30 = vector.broadcast %29 : vector<1x64xf32> to vector<64x64xf32>
    %31 = arith.addf %28, %30 : vector<64x64xf32>
    %cst_14 = arith.constant 0.000000e+00 : f32
    %32 = vector.broadcast %cst_14 : f32 to vector<64x64xf32>
    %33 = arith.maximumf %31, %32 : vector<64x64xf32>
    %c0_15 = arith.constant 0 : index
    %c0_16 = arith.constant 0 : index
    %34 = vector.load %arg6[%c0_15, %c0_16] : memref<64x60xf32, #tpu.memory_space<vmem>>, vector<64x60xf32>
    %cst_17 = arith.constant dense<0.000000e+00> : vector<64x60xf32>
    %35 = tpu.matmul %33, %34, %cst_17 {dimension_numbers = #tpu.dot_dimension_numbers<[1], [0], [0], [1], [0, 0, 1, 1], [], []>} : vector<64x64xf32>, vector<64x60xf32>, vector<64x60xf32> -> vector<64x60xf32>
    %36 = arith.addf %7, %35 : vector<64x60xf32>
    %c0_18 = arith.constant 0 : index
    %c0_19 = arith.constant 0 : index
    %37 = vector.load %arg7[%c0_18, %c0_19] : memref<1x60xf32, #tpu.memory_space<vmem>>, vector<1x60xf32>
    %38 = vector.broadcast %37 : vector<1x60xf32> to vector<64x60xf32>
    %39 = arith.addf %36, %38 : vector<64x60xf32>
    %c0_20 = arith.constant 0 : index
    %c0_21 = arith.constant 0 : index
    %40 = vector.load %arg8[%c0_20, %c0_21] : memref<64x60xf32, #tpu.memory_space<vmem>>, vector<64x60xf32>
    tpu.vector_store %arg8[%c0_20, %c0_21], %39 {strides = array<i32>} : memref<64x60xf32, #tpu.memory_space<vmem>>, vector<64x60xf32>,
    return
  }
  func.func @transform_0(%arg0: i32) -> (i32, i32) {
    %c0_i32 = arith.constant 0 : i32
    %c0_i32_0 = arith.constant 0 : i32
    return %arg0, %c0_i32 : i32, i32
  }
  func.func @transform_1(%arg0: i32) -> (i32, i32) {
    %c0_i32 = arith.constant 0 : i32
    %c0_i32_0 = arith.constant 0 : i32
    %c0_i32_1 = arith.constant 0 : i32
    return %c0_i32, %c0_i32_0 : i32, i32
  }
  func.func @transform_2(%arg0: i32) -> (i32, i32) {
    %c0_i32 = arith.constant 0 : i32
    %c0_i32_0 = arith.constant 0 : i32
    %c0_i32_1 = arith.constant 0 : i32
    return %c0_i32, %c0_i32_0 : i32, i32
  }
  func.func @transform_3(%arg0: i32) -> (i32, i32) {
    %c0_i32 = arith.constant 0 : i32
    %c0_i32_0 = arith.constant 0 : i32
    %c0_i32_1 = arith.constant 0 : i32
    return %c0_i32, %c0_i32_0 : i32, i32
  }
  func.func @transform_4(%arg0: i32) -> (i32, i32) {
    %c0_i32 = arith.constant 0 : i32
    %c0_i32_0 = arith.constant 0 : i32
    %c0_i32_1 = arith.constant 0 : i32
    return %c0_i32, %c0_i32_0 : i32, i32
  }
  func.func @transform_5(%arg0: i32) -> (i32, i32) {
    %c0_i32 = arith.constant 0 : i32
    %c0_i32_0 = arith.constant 0 : i32
    %c0_i32_1 = arith.constant 0 : i32
    return %c0_i32, %c0_i32_0 : i32, i32
  }
  func.func @transform_6(%arg0: i32) -> (i32, i32) {
    %c0_i32 = arith.constant 0 : i32
    %c0_i32_0 = arith.constant 0 : i32
    %c0_i32_1 = arith.constant 0 : i32
    return %c0_i32, %c0_i32_0 : i32, i32
  }
  func.func @transform_7(%arg0: i32) -> (i32, i32) {
    %c0_i32 = arith.constant 0 : i32
    %c0_i32_0 = arith.constant 0 : i32
    return %arg0, %c0_i32 : i32, i32
  }
}

</mosaic_0001>

<llo_original>
// kernel: decoder_res_cat.1
$region0: #{decoder_res_cat.1}
  #allocation0 [shape = 'u32[]', space=smem, size = 0x4, offset = 0x4, fixed_abs, tag = 'smem constant byte address 0x4 - core index']
  #allocation1 [shape = 'u32[144,128]{1,0:T(1,128)}', space=vmem, size = 0x12000, scoped, tag = 'internal scratch']
  %s0 = inlined_call_operand.vmem [shape: f32[128,32], index: 0, kind: input, shape index: {}]
  %s1 = inlined_call_operand.vmem [shape: f32[32,124], index: 1, kind: input, shape index: {}]
  %s2 = inlined_call_operand.vmem [shape: f32[1,64], index: 2, kind: input, shape index: {}]
  %s3 = inlined_call_operand.vmem [shape: f32[1,64], index: 3, kind: input, shape index: {}]
  %s4 = inlined_call_operand.vmem [shape: f32[1,64], index: 4, kind: input, shape index: {}]
  %s5 = inlined_call_operand.vmem [shape: f32[64,60], index: 5, kind: input, shape index: {}]
  %s6 = inlined_call_operand.vmem [shape: f32[1,60], index: 6, kind: input, shape index: {}]
  %s7 = inlined_call_operand.vmem [shape: f32[128,60], index: 7, kind: output, shape index: {}]
  %s8 = sld [smem:[#allocation0]]
  $region61: #{decoder_res_cat.1} parent=0
    _
  %s10 = ssub.s32 1, %s8
  %s11 = scalar_select 0, %s10, %s8
  loop: start=0, step=1, limit=4
  $region2: #{decoder_res_cat.1} parent=0 // loop_pre_header
    _
  $region3: #{decoder_res_cat.1} parent=0 // loop_header
    %s13 = sphi 0, %s17
    %p14 = scmp.ge.s32.totalorder %s13, 4
    %s23 = sphi 0, %s25
    %s26 = sphi 0, %s23
    %s27 = sphi 0, %s26
    %s43 = sphi 0, %s27
    %s47 = sphi 0, %s47
    %s49 = sphi 0, %s47
    %s50 = sphi 0, %s49
    %s64 = sphi 0, %s50
    %s68 = sphi 0, %s68
    %s70 = sphi 0, %s68
    %s71 = sphi 0, %s70
    %s85 = sphi 0, %s71
    %s89 = sphi 0, %s89
    %s91 = sphi 0, %s89
    %s92 = sphi 0, %s91
    %s106 = sphi 0, %s92
    %s110 = sphi 0, %s110
    %s112 = sphi 0, %s110
    %s113 = sphi 0, %s112
    %s127 = sphi 0, %s113
    %s131 = sphi 0, %s131
    %s133 = sphi 0, %s131
    %s134 = sphi 0, %s133
    %s148 = sphi 0, %s134
    %s152 = sphi 0, %s152
    %s154 = sphi 0, %s152
    %s155 = sphi 0, %s154
    %s169 = sphi 0, %s155
    %s175 = sphi 0, %s177
    %s178 = sphi 0, %s175
    %s179 = sphi 0, %s178
    %s195 = sphi 0, %s179
  $region4: #{decoder_res_cat.1} parent=0 // loop_header_branch
    %16 = sbr.rel (%p14) target = $region8
  $region5: #{decoder_res_cat.1} parent=0 // loop_body
    %s18 = ssub.s32 %s13, 1
    %s19 = ssub.s32 %s13, 2
    %s20 = sadd.s32 %s13, 1
    %s21 = ssub.s32 %s13, %s20
    %p22 = scmp.eq.s32.totalorder %s21, 0
    %s24 = sadd.s32 %s23, 1
    %s25 = scalar_select %p22, %s23, %s24
    %p28 = pneg %p22
    %p29 = scmp.eq.s32.totalorder %s13, 1
    %p30 = por %p28, %p29
    %p31 = scmp.ne.s32.totalorder %s23, %s26
    %p32 = scmp.eq.s32.totalorder %s13, 0
    %p33 = por %p31, %p32
    %p34 = scmp.ne.s32.totalorder %s23, %s26
    %p35 = scmp.eq.s32.totalorder %s18, 1
    %p36 = por %p34, %p35
    %p37 = scmp.ne.s32.totalorder %s26, %s27
    %p38 = scmp.eq.s32.totalorder %s18, 0
    %p39 = por %p37, %p38
    %p40 = scmp.ne.s32.totalorder %s26, %s27
    %p41 = scmp.eq.s32.totalorder %s19, 1
    %p42 = por %p40, %p41
    %p44 = scmp.ne.s32.totalorder %s27, %s43
    %p45 = scmp.eq.s32.totalorder %s19, 0
    %p46 = por %p44, %p45
    %s48 = sadd.s32 %s47, 1
    %p51 = scmp.eq.s32.totalorder %s13, 1
    %p52 = scmp.ne.s32.totalorder %s47, %s49
    %p53 = scmp.eq.s32.totalorder %s13, 0
    %p54 = por %p52, %p53
    %p55 = scmp.ne.s32.totalorder %s47, %s49
    %p56 = scmp.eq.s32.totalorder %s18, 1
    %p57 = por %p55, %p56
    %p58 = scmp.ne.s32.totalorder %s49, %s50
    %p59 = scmp.eq.s32.totalorder %s18, 0
    %p60 = por %p58, %p59
    %p61 = scmp.ne.s32.totalorder %s49, %s50
    %p62 = scmp.eq.s32.totalorder %s19, 1
    %p63 = por %p61, %p62
    %p65 = scmp.ne.s32.totalorder %s50, %s64
    %p66 = scmp.eq.s32.totalorder %s19, 0
    %p67 = por %p65, %p66
    %s69 = sadd.s32 %s68, 1
    %p72 = scmp.eq.s32.totalorder %s13, 1
    %p73 = scmp.ne.s32.totalorder %s68, %s70
    %p74 = scmp.eq.s32.totalorder %s13, 0
    %p75 = por %p73, %p74
    %p76 = scmp.ne.s32.totalorder %s68, %s70
    %p77 = scmp.eq.s32.totalorder %s18, 1
    %p78 = por %p76, %p77
    %p79 = scmp.ne.s32.totalorder %s70, %s71
    %p80 = scmp.eq.s32.totalorder %s18, 0
    %p81 = por %p79, %p80
    %p82 = scmp.ne.s32.totalorder %s70, %s71
    %p83 = scmp.eq.s32.totalorder %s19, 1
    %p84 = por %p82, %p83
    %p86 = scmp.ne.s32.totalorder %s71, %s85
    %p87 = scmp.eq.s32.totalorder %s19, 0
    %p88 = por %p86, %p87
    %s90 = sadd.s32 %s89, 1
    %p93 = scmp.eq.s32.totalorder %s13, 1
    %p94 = scmp.ne.s32.totalorder %s89, %s91
    %p95 = scmp.eq.s32.totalorder %s13, 0
    %p96 = por %p94, %p95
    %p97 = scmp.ne.s32.totalorder %s89, %s91
    %p98 = scmp.eq.s32.totalorder %s18, 1
    %p99 = por %p97, %p98
    %p100 = scmp.ne.s32.totalorder %s91, %s92
    %p101 = scmp.eq.s32.totalorder %s18, 0
    %p102 = por %p100, %p101
    %p103 = scmp.ne.s32.totalorder %s91, %s92
    %p104 = scmp.eq.s32.totalorder %s19, 1
    %p105 = por %p103, %p104
    %p107 = scmp.ne.s32.totalorder %s92, %s106
    %p108 = scmp.eq.s32.totalorder %s19, 0
    %p109 = por %p107, %p108
    %s111 = sadd.s32 %s110, 1
    %p114 = scmp.eq.s32.totalorder %s13, 1
    %p115 = scmp.ne.s32.totalorder %s110, %s112
    %p116 = scmp.eq.s32.totalorder %s13, 0
    %p117 = por %p115, %p116
    %p118 = scmp.ne.s32.totalorder %s110, %s112
    %p119 = scmp.eq.s32.totalorder %s18, 1
    %p120 = por %p118, %p119
    %p121 = scmp.ne.s32.totalorder %s112, %s113
    %p122 = scmp.eq.s32.totalorder %s18, 0
    %p123 = por %p121, %p122
    %p124 = scmp.ne.s32.totalorder %s112, %s113
    %p125 = scmp.eq.s32.totalorder %s19, 1
    %p126 = por %p124, %p125
    %p128 = scmp.ne.s32.totalorder %s113, %s127
    %p129 = scmp.eq.s32.totalorder %s19, 0
    %p130 = por %p128, %p129
    %s132 = sadd.s32 %s131, 1
    %p135 = scmp.eq.s32.totalorder %s13, 1
    %p136 = scmp.ne.s32.totalorder %s131, %s133
    %p137 = scmp.eq.s32.totalorder %s13, 0
    %p138 = por %p136, %p137
    %p139 = scmp.ne.s32.totalorder %s131, %s133
    %p140 = scmp.eq.s32.totalorder %s18, 1
    %p141 = por %p139, %p140
    %p142 = scmp.ne.s32.totalorder %s133, %s134
    %p143 = scmp.eq.s32.totalorder %s18, 0
    %p144 = por %p142, %p143
    %p145 = scmp.ne.s32.totalorder %s133, %s134
    %p146 = scmp.eq.s32.totalorder %s19, 1
    %p147 = por %p145, %p146
    %p149 = scmp.ne.s32.totalorder %s134, %s148
    %p150 = scmp.eq.s32.totalorder %s19, 0
    %p151 = por %p149, %p150
    %s153 = sadd.s32 %s152, 1
    %p156 = scmp.eq.s32.totalorder %s13, 1
    %p157 = scmp.ne.s32.totalorder %s152, %s154
    %p158 = scmp.eq.s32.totalorder %s13, 0
    %p159 = por %p157, %p158
    %p160 = scmp.ne.s32.totalorder %s152, %s154
    %p161 = scmp.eq.s32.totalorder %s18, 1
    %p162 = por %p160, %p161
    %p163 = scmp.ne.s32.totalorder %s154, %s155
    %p164 = scmp.eq.s32.totalorder %s18, 0
    %p165 = por %p163, %p164
    %p166 = scmp.ne.s32.totalorder %s154, %s155
    %p167 = scmp.eq.s32.totalorder %s19, 1
    %p168 = por %p166, %p167
    %p170 = scmp.ne.s32.totalorder %s155, %s169
    %p171 = scmp.eq.s32.totalorder %s19, 0
    %p172 = por %p170, %p171
    %s173 = ssub.s32 %s13, %s20
    %p174 = scmp.eq.s32.totalorder %s173, 0
    %s176 = sadd.s32 %s175, 1
    %s177 = scalar_select %p174, %s175, %s176
    %p180 = pneg %p174
    %p181 = scmp.eq.s32.totalorder %s13, 1
    %p182 = por %p180, %p181
    %p183 = scmp.ne.s32.totalorder %s175, %s178
    %p184 = scmp.eq.s32.totalorder %s13, 0
    %p185 = por %p183, %p184
    %p186 = scmp.ne.s32.totalorder %s175, %s178
    %p187 = scmp.eq.s32.totalorder %s18, 1
    %p188 = por %p186, %p187
    %p189 = scmp.ne.s32.totalorder %s178, %s179
    %p190 = scmp.eq.s32.totalorder %s18, 0
    %p191 = por %p189, %p190
    %p192 = scmp.ne.s32.totalorder %s178, %s179
    %p193 = scmp.eq.s32.totalorder %s19, 1
    %p194 = por %p192, %p193
    %p196 = scmp.ne.s32.totalorder %s179, %s195
    %p197 = scmp.eq.s32.totalorder %s19, 0
    %p198 = por %p196, %p197
    %p199 = scmp.le.s32.totalorder 1, %s13
    %p200 = scmp.lt.s32.totalorder %s13, 3
    %p201 = pnand %p199, %p200
    %p202 = pneg %p201
    // Predicated region
    $region9: #{decoder_res_cat.1} parent=5 // pred_check
      _
    $region10: #{decoder_res_cat.1} parent=5 // pred_check_branch
      %204 = sbr.rel (%p201) target = $region12
    $region11: #{decoder_res_cat.1} parent=5 // pred_region
      %s205 = ssub.s32 %s13, 1
      // Predicated region
      $region13: #{decoder_res_cat.1} parent=11 // pred_check
        %p206 = pneg %p60
      $region14: #{decoder_res_cat.1} parent=11 // pred_check_branch
        %208 = sbr.rel (%p206) target = $region16
      $region15: #{decoder_res_cat.1} parent=11 // pred_region
        _
      $region16: #{decoder_res_cat.1} parent=11 // pred_fallthru
        _
      // Predicated region
      $region17: #{decoder_res_cat.1} parent=11 // pred_check
        %p209 = pneg %p81
      $region18: #{decoder_res_cat.1} parent=11 // pred_check_branch
        %211 = sbr.rel (%p209) target = $region20
      $region19: #{decoder_res_cat.1} parent=11 // pred_region
        _
      $region20: #{decoder_res_cat.1} parent=11 // pred_fallthru
        _
      // Predicated region
      $region21: #{decoder_res_cat.1} parent=11 // pred_check
        %p212 = pneg %p102
      $region22: #{decoder_res_cat.1} parent=11 // pred_check_branch
        %214 = sbr.rel (%p212) target = $region24
      $region23: #{decoder_res_cat.1} parent=11 // pred_region
        _
      $region24: #{decoder_res_cat.1} parent=11 // pred_fallthru
        _
      // Predicated region
      $region25: #{decoder_res_cat.1} parent=11 // pred_check
        %p215 = pneg %p123
      $region26: #{decoder_res_cat.1} parent=11 // pred_check_branch
        %217 = sbr.rel (%p215) target = $region28
      $region27: #{decoder_res_cat.1} parent=11 // pred_region
        _
      $region28: #{decoder_res_cat.1} parent=11 // pred_fallthru
        _
      // Predicated region
      $region29: #{decoder_res_cat.1} parent=11 // pred_check
        %p218 = pneg %p144
      $region30: #{decoder_res_cat.1} parent=11 // pred_check_branch
        %220 = sbr.rel (%p218) target = $region32
      $region31: #{decoder_res_cat.1} parent=11 // pred_region
        _
      $region32: #{decoder_res_cat.1} parent=11 // pred_fallthru
        _
      // Predicated region
      $region33: #{decoder_res_cat.1} parent=11 // pred_check
        %p221 = pneg %p165
      $region34: #{decoder_res_cat.1} parent=11 // pred_check_branch
        %223 = sbr.rel (%p221) target = $region36
      $region35: #{decoder_res_cat.1} parent=11 // pred_region
        _
      $region36: #{decoder_res_cat.1} parent=11 // pred_fallthru
        _
    $region12: #{decoder_res_cat.1} parent=5 // pred_fallthru
      _
    %p224 = scmp.lt.s32.totalorder %s13, 2
    // Predicated region
    $region37: #{decoder_res_cat.1} parent=5 // pred_check
      %p225 = pneg %p224
    $region38: #{decoder_res_cat.1} parent=5 // pred_check_branch
      %227 = sbr.rel (%p225) target = $region40
    $region39: #{decoder_res_cat.1} parent=5 // pred_region
      // Predicated region
      $region41: #{decoder_res_cat.1} parent=39 // pred_check
        %p228 = pneg %p33
      $region42: #{decoder_res_cat.1} parent=39 // pred_check_branch
        %230 = sbr.rel (%p228) target = $region44
      $region43: #{decoder_res_cat.1} parent=39 // pred_region
        %s231 = smul.u32 8, %s13
        %p232 = scmp.lt.s32.totalorder %s231, 15
        %s233 = scalar_select %p232, %s231, 15
        %s234 = smul.addr %s233, 8
        %s235 = scalar_lea.vmem %s0, %s234
        %s236 = smul.u32 8, %s13
      $region44: #{decoder_res_cat.1} parent=39 // pred_fallthru
        _
    $region40: #{decoder_res_cat.1} parent=5 // pred_fallthru
      _
    %p237 = scmp.le.s32.totalorder 1, %s13
    %p238 = scmp.lt.s32.totalorder %s13, 3
    %p239 = pnand %p237, %p238
    %p240 = pneg %p239
    // Predicated region
    $region45: #{decoder_res_cat.1} parent=5 // pred_check
      _
    $region46: #{decoder_res_cat.1} parent=5 // pred_check_branch
      %242 = sbr.rel (%p239) target = $region48
    $region47: #{decoder_res_cat.1} parent=5 // pred_region
      %s243 = ssub.s32 %s13, 1
      %s244 = smul.u32 8, %s18
      %p245 = scmp.lt.s32.totalorder %s244, 15
      %s246 = scalar_select %p245, %s244, 15
      %s247 = smul.addr %s246, 8
      %s248 = scalar_lea.vmem %s0, %s247
      %p249 = pneg %p39
      %p250 = pneg %p36
      %p251 = pneg %p60
      %p252 = pneg %p57
      %p253 = pneg %p81
      %p254 = pneg %p78
      %p255 = pneg %p102
      %p256 = pneg %p99
      %p257 = pneg %p123
      %p258 = pneg %p120
      %p259 = pneg %p144
      %p260 = pneg %p141
      %p261 = pneg %p165
      %p262 = pneg %p162
      %p263 = pneg %p191
      %p264 = pneg %p188
      %s265 = smul.u32 8, %s18
      %p266 = scmp.lt.s32.totalorder %s265, 15
      %s267 = scalar_select %p266, %s265, 15
      %s268 = smul.addr %s267, 8
      %s269 = scalar_lea.vmem %s7, %s268
      %s270 = smul.u32 8, %s18
      %p271 = scmp.lt.s32.totalorder %s270, 15
      %s272 = scalar_select %p271, %s270, 15
      %s273 = smul.addr %s272, 8
      %s274 = scalar_lea.vmem %s0, %s273
      %s275 = smul.u32 8, %s18
      %s276 = smul.u32 8, %s18
      %p277 = scmp.lt.s32.totalorder %s276, 15
      %s278 = scalar_select %p277, %s276, 15
      %s279 = smul.addr %s278, 8
      %s280 = scalar_lea.vmem %s7, %s279
      %s281 = smul.u32 8, %s18
      %v282 = vld [vmem:[%s274] sm:$0xff]
      %v283 = vld [vmem:[%s274 + $0x8] sm:$0xff]
      %v284 = vld [vmem:[%s274 + $0x10] sm:$0xff]
      %v285 = vld [vmem:[%s274 + $0x18] sm:$0xff]
      %v286 = vld [vmem:[%s274 + $0x20] sm:$0xff]
      %v287 = vld [vmem:[%s274 + $0x28] sm:$0xff]
      %v288 = vld [vmem:[%s274 + $0x30] sm:$0xff]
      %v289 = vld [vmem:[%s274 + $0x38] sm:$0xff]
      %v290 = vld [vmem:[%s1] sm:$0xff]
      %v291 = vld [vmem:[%s1 + $0x8] sm:$0xff]
      %v292 = vld [vmem:[%s1 + $0x10] sm:$0xff]
      %v293 = vld [vmem:[%s1 + $0x18] sm:$0xff]
      %vm294 = vcmask 261120
      %v296 = vsel %vm294, %v282, 0
      %v299 = vsel %vm294, %v283, 0
      %v302 = vsel %vm294, %v284, 0
      %v305 = vsel %vm294, %v285, 0
      %v308 = vsel %vm294, %v286, 0
      %v311 = vsel %vm294, %v287, 0
      %v314 = vsel %vm294, %v288, 0
      %v317 = vsel %vm294, %v289, 0
      %319 = vmatprep.subr.mxu0 0.0
      %320 = vmatpush1.msra.mxu0 %v290
      %321 = vmatprep.subr.mxu0 0.0
      %322 = vmatpush1.msra.mxu0 %v291
      %323 = vmatprep.subr.mxu0 0.0
      %324 = vmatpush1.msra.mxu0 %v292
      %325 = vmatprep.subr.mxu0 0.0
      %326 = vmatpush1.msra.mxu0 %v293
      %327 = vmatprep.subr.mxu0 0.0
      %328 = vmatpush1.msra.mxu0 0.0
      %329 = vmatprep.subr.mxu0 0.0
      %330 = vmatpush1.msra.mxu0 0.0
      %331 = vmatprep.subr.mxu0 0.0
      %332 = vmatpush1.msra.mxu0 0.0
      %333 = vmatprep.subr.mxu0 0.0
      %334 = vmatpush1.msra.mxu0 0.0
      %335 = vmatprep.subr.mxu0 0.0
      %336 = vmatpush1.msra.mxu0 0.0
      %337 = vmatprep.subr.mxu0 0.0
      %338 = vmatpush1.msra.mxu0 0.0
      %339 = vmatprep.subr.mxu0 0.0
      %340 = vmatpush1.msra.mxu0 0.0
      %341 = vmatprep.subr.mxu0 0.0
      %342 = vmatpush1.msra.mxu0 0.0
      %343 = vmatprep.subr.mxu0 0.0
      %344 = vmatpush1.msra.mxu0 0.0
      %345 = vmatprep.subr.mxu0 0.0
      %346 = vmatpush1.msra.mxu0 0.0
      %347 = vmatprep.subr.mxu0 0.0
      %348 = vmatpush1.msra.mxu0 0.0
      %349 = vmatprep.subr.mxu0 0.0
      %350 = vmatpush1.msra.mxu0 0.0
      %351 = vmatprep.subr.mxu0 0.0
      %352 = vmatpush1.msra.mxu0 0.0
      %353 = vmatprep.subr.mxu0 0.0
      %354 = vmatpush1.msra.mxu0 0.0
      %355 = vmatprep.subr.mxu0 0.0
      %356 = vmatpush1.msra.mxu0 0.0
      %357 = vmatprep.subr.mxu0 0.0
      %358 = vmatpush1.msra.mxu0 0.0
      %359 = vmatprep.subr.mxu0 0.0
      %360 = vmatpush1.msra.mxu0 0.0
      %361 = vmatprep.subr.mxu0 0.0
      %362 = vmatpush1.msra.mxu0 0.0
      %363 = vmatprep.subr.mxu0 0.0
      %364 = vmatpush1.msra.mxu0 0.0
      %365 = vmatprep.subr.mxu0 0.0
      %366 = vmatpush1.msra.mxu0 0.0
      %367 = vmatprep.subr.mxu0 0.0
      %368 = vmatpush1.msra.mxu0 0.0
      %369 = vmatprep.subr.mxu0 0.0
      %370 = vmatpush1.msra.mxu0 0.0
      %371 = vmatprep.subr.mxu0 0.0
      %372 = vmatpush1.msra.mxu0 0.0
      %373 = vmatprep.subr.mxu0 0.0
      %374 = vmatpush1.msra.mxu0 0.0
      %375 = vmatprep.subr.mxu0 0.0
      %376 = vmatpush1.msra.mxu0 0.0
      %377 = vmatprep.subr.mxu0 0.0
      %378 = vmatpush1.msra.mxu0 0.0
      %379 = vmatprep.subr.mxu0 0.0
      %380 = vmatpush1.msra.mxu0 0.0
      %381 = vmatprep.subr.mxu0 0.0
      %382 = vmatpush1.msra.mxu0 0.0
      %383 = vmatprep.mubr.f32.mxu0 0.0
      %384 = vmatmul.mubr.f32.gmra.mrb[0].mxu0 %v296
      %v385 = vpop.f32.mrb[0].mxu0
      %v386 = vadd.f32 0.0, %v385
      %v387 = vpop.f32.mrb[0].mxu0
      %388 = vmatprep.mubr.f32.mxu0 0.0
      %389 = vmatmul.mubr.f32.gmra.mrb[0].mxu0 %v299
      %v390 = vpop.f32.mrb[0].mxu0
      %v391 = vadd.f32 0.0, %v390
      %v392 = vpop.f32.mrb[0].mxu0
      %393 = vmatprep.mubr.f32.mxu0 0.0
      %394 = vmatmul.mubr.f32.gmra.mrb[0].mxu0 %v302
      %v395 = vpop.f32.mrb[0].mxu0
      %v396 = vadd.f32 0.0, %v395
      %v397 = vpop.f32.mrb[0].mxu0
      %398 = vmatprep.mubr.f32.mxu0 0.0
      %399 = vmatmul.mubr.f32.gmra.mrb[0].mxu0 %v305
      %v400 = vpop.f32.mrb[0].mxu0
      %v401 = vadd.f32 0.0, %v400
      %v402 = vpop.f32.mrb[0].mxu0
      %403 = vmatprep.mubr.f32.mxu0 0.0
      %404 = vmatmul.mubr.f32.gmra.mrb[0].mxu0 %v308
      %v405 = vpop.f32.mrb[0].mxu0
      %v406 = vadd.f32 0.0, %v405
      %v407 = vpop.f32.mrb[0].mxu0
      %408 = vmatprep.mubr.f32.mxu0 0.0
      %409 = vmatmul.mubr.f32.gmra.mrb[0].mxu0 %v311
      %v410 = vpop.f32.mrb[0].mxu0
      %v411 = vadd.f32 0.0, %v410
      %v412 = vpop.f32.mrb[0].mxu0
      %413 = vmatprep.mubr.f32.mxu0 0.0
      %414 = vmatmul.mubr.f32.gmra.mrb[0].mxu0 %v314
      %v415 = vpop.f32.mrb[0].mxu0
      %v416 = vadd.f32 0.0, %v415
      %v417 = vpop.f32.mrb[0].mxu0
      %418 = vmatprep.mubr.f32.mxu0 0.0
      %419 = vmatmul.mubr.f32.gmra.mrb[0].mxu0 %v317
      %v420 = vpop.f32.mrb[0].mxu0
      %v421 = vadd.f32 0.0, %v420
      %v422 = vpop.f32.mrb[0].mxu0
      %423 = vdwg.mxu0
      %v424 = vld [vmem:[%s2] sm:$0x1]
      %v426 = vlaneseq
      %v427 = vshrl.u32 %v426, 7
      %v428 = vsub.s32 0, %v427
      %v429 = vrot.slane %v424, %v428
      %v431 = vadd.f32 %v386, %v429
      %v432 = vadd.f32 %v391, %v429
      %v433 = vadd.f32 %v396, %v429
      %v434 = vadd.f32 %v401, %v429
      %v435 = vadd.f32 %v406, %v429
      %v436 = vadd.f32 %v411, %v429
      %v437 = vadd.f32 %v416, %v429
      %v438 = vadd.f32 %v421, %v429
      %vm439 = vcmask 523264
      %v440 = vsel %vm439, %v431, 0.0
      %441 = vadd.xlane.f32.xlu0 %v440
      %v442 = vpop.xlane.xlu0 %441
      %v443 = vsel %vm439, %v432, 0.0
      %444 = vadd.xlane.f32.xlu0 %v443
      %v445 = vpop.xlane.xlu0 %444
      %v446 = vsel %vm439, %v433, 0.0
      %447 = vadd.xlane.f32.xlu0 %v446
      %v448 = vpop.xlane.xlu0 %447
      %v449 = vsel %vm439, %v434, 0.0
      %450 = vadd.xlane.f32.xlu0 %v449
      %v451 = vpop.xlane.xlu0 %450
      %v452 = vsel %vm439, %v435, 0.0
      %453 = vadd.xlane.f32.xlu0 %v452
      %v454 = vpop.xlane.xlu0 %453
      %v455 = vsel %vm439, %v436, 0.0
      %456 = vadd.xlane.f32.xlu0 %v455
      %v457 = vpop.xlane.xlu0 %456
      %v458 = vsel %vm439, %v437, 0.0
      %459 = vadd.xlane.f32.xlu0 %v458
      %v460 = vpop.xlane.xlu0 %459
      %v461 = vsel %vm439, %v438, 0.0
      %462 = vadd.xlane.f32.xlu0 %v461
      %v463 = vpop.xlane.xlu0 %462
      %v464 = vrcp.pop 64.0
      %v465 = vmul.f32 %v442, %v464
      %v466 = vmul.f32 %v445, %v464
      %v467 = vmul.f32 %v448, %v464
      %v468 = vmul.f32 %v451, %v464
      %v469 = vmul.f32 %v454, %v464
      %v470 = vmul.f32 %v457, %v464
      %v471 = vmul.f32 %v460, %v464
      %v472 = vmul.f32 %v463, %v464
      %v473 = vsub.f32 %v431, %v465
      %v474 = vsub.f32 %v432, %v466
      %v475 = vsub.f32 %v433, %v467
      %v476 = vsub.f32 %v434, %v468
      %v477 = vsub.f32 %v435, %v469
      %v478 = vsub.f32 %v436, %v470
      %v479 = vsub.f32 %v437, %v471
      %v480 = vsub.f32 %v438, %v472
      %v481 = vmul.f32 %v473, %v473
      %v482 = vmul.f32 %v474, %v474
      %v483 = vmul.f32 %v475, %v475
      %v484 = vmul.f32 %v476, %v476
      %v485 = vmul.f32 %v477, %v477
      %v486 = vmul.f32 %v478, %v478
      %v487 = vmul.f32 %v479, %v479
      %v488 = vmul.f32 %v480, %v480
      %v489 = vsel %vm439, %v481, 0.0
      %490 = vadd.xlane.f32.xlu0 %v489
      %v491 = vpop.xlane.xlu0 %490
      %v492 = vsel %vm439, %v482, 0.0
      %493 = vadd.xlane.f32.xlu0 %v492
      %v494 = vpop.xlane.xlu0 %493
      %v495 = vsel %vm439, %v483, 0.0
      %496 = vadd.xlane.f32.xlu0 %v495
      %v497 = vpop.xlane.xlu0 %496
      %v498 = vsel %vm439, %v484, 0.0
      %499 = vadd.xlane.f32.xlu0 %v498
      %v500 = vpop.xlane.xlu0 %499
      %v501 = vsel %vm439, %v485, 0.0
      %502 = vadd.xlane.f32.xlu0 %v501
      %v503 = vpop.xlane.xlu0 %502
      %v504 = vsel %vm439, %v486, 0.0
      %505 = vadd.xlane.f32.xlu0 %v504
      %v506 = vpop.xlane.xlu0 %505
      %v507 = vsel %vm439, %v487, 0.0
      %508 = vadd.xlane.f32.xlu0 %v507
      %v509 = vpop.xlane.xlu0 %508
      %v510 = vsel %vm439, %v488, 0.0
      %511 = vadd.xlane.f32.xlu0 %v510
      %v512 = vpop.xlane.xlu0 %511
      %v513 = vmul.f32 %v491, %v464
      %v514 = vmul.f32 %v494, %v464
      %v515 = vmul.f32 %v497, %v464
      %v516 = vmul.f32 %v500, %v464
      %v517 = vmul.f32 %v503, %v464
      %v518 = vmul.f32 %v506, %v464
      %v519 = vmul.f32 %v509, %v464
      %v520 = vmul.f32 %v512, %v464
      %v521 = vadd.f32 %v513, 1e-05
      %v522 = vadd.f32 %v514, 1e-05
      %v523 = vadd.f32 %v515, 1e-05
      %v524 = vadd.f32 %v516, 1e-05
      %v525 = vadd.f32 %v517, 1e-05
      %v526 = vadd.f32 %v518, 1e-05
      %v527 = vadd.f32 %v519, 1e-05
      %v528 = vadd.f32 %v520, 1e-05
      %v529 = vrsqrt.pop %v521
      %v530 = vrsqrt.pop %v522
      %v531 = vrsqrt.pop %v523
      %v532 = vrsqrt.pop %v524
      %v533 = vrsqrt.pop %v525
      %v534 = vrsqrt.pop %v526
      %v535 = vrsqrt.pop %v527
      %v536 = vrsqrt.pop %v528
      %v537 = vmul.f32 %v473, %v529
      %v538 = vmul.f32 %v474, %v530
      %v539 = vmul.f32 %v475, %v531
      %v540 = vmul.f32 %v476, %v532
      %v541 = vmul.f32 %v477, %v533
      %v542 = vmul.f32 %v478, %v534
      %v543 = vmul.f32 %v479, %v535
      %v544 = vmul.f32 %v480, %v536
      %v545 = vld [vmem:[%s3] sm:$0x1]
      %v547 = vlaneseq
      %v548 = vshrl.u32 %v547, 7
      %v549 = vsub.s32 0, %v548
      %v550 = vrot.slane %v545, %v549
      %v552 = vmul.f32 %v537, %v550
      %v553 = vmul.f32 %v538, %v550
      %v554 = vmul.f32 %v539, %v550
      %v555 = vmul.f32 %v540, %v550
      %v556 = vmul.f32 %v541, %v550
      %v557 = vmul.f32 %v542, %v550
      %v558 = vmul.f32 %v543, %v550
      %v559 = vmul.f32 %v544, %v550
      %v560 = vld [vmem:[%s4] sm:$0x1]
      %v562 = vlaneseq
      %v563 = vshrl.u32 %v562, 7
      %v564 = vsub.s32 0, %v563
      %v565 = vrot.slane %v560, %v564
      %v567 = vadd.f32 %v552, %v565
      %v568 = vadd.f32 %v553, %v565
      %v569 = vadd.f32 %v554, %v565
      %v570 = vadd.f32 %v555, %v565
      %v571 = vadd.f32 %v556, %v565
      %v572 = vadd.f32 %v557, %v565
      %v573 = vadd.f32 %v558, %v565
      %v574 = vadd.f32 %v559, %v565
      %v575 = vmax.f32 %v567, 0.0
      %v576 = vmax.f32 %v568, 0.0
      %v577 = vmax.f32 %v569, 0.0
      %v578 = vmax.f32 %v570, 0.0
      %v579 = vmax.f32 %v571, 0.0
      %v580 = vmax.f32 %v572, 0.0
      %v581 = vmax.f32 %v573, 0.0
      %v582 = vmax.f32 %v574, 0.0
      %v583 = vld [vmem:[%s5] sm:$0xff]
      %v584 = vld [vmem:[%s5 + $0x8] sm:$0xff]
      %v585 = vld [vmem:[%s5 + $0x10] sm:$0xff]
      %v586 = vld [vmem:[%s5 + $0x18] sm:$0xff]
      %v587 = vld [vmem:[%s5 + $0x20] sm:$0xff]
      %v588 = vld [vmem:[%s5 + $0x28] sm:$0xff]
      %v589 = vld [vmem:[%s5 + $0x30] sm:$0xff]
      %v590 = vld [vmem:[%s5 + $0x38] sm:$0xff]
      %v592 = vsel %vm439, %v575, 0
      %v595 = vsel %vm439, %v576, 0
      %v598 = vsel %vm439, %v577, 0
      %v601 = vsel %vm439, %v578, 0
      %v604 = vsel %vm439, %v579, 0
      %v607 = vsel %vm439, %v580, 0
      %v610 = vsel %vm439, %v581, 0
      %v613 = vsel %vm439, %v582, 0
      %615 = vmatprep.subr.mxu0 0.0
      %616 = vmatpush1.msra.mxu0 %v583
      %617 = vmatprep.subr.mxu0 0.0
      %618 = vmatpush1.msra.mxu0 %v584
      %619 = vmatprep.subr.mxu0 0.0
      %620 = vmatpush1.msra.mxu0 %v585
      %621 = vmatprep.subr.mxu0 0.0
      %622 = vmatpush1.msra.mxu0 %v586
      %623 = vmatprep.subr.mxu0 0.0
      %624 = vmatpush1.msra.mxu0 %v587
      %625 = vmatprep.subr.mxu0 0.0
      %626 = vmatpush1.msra.mxu0 %v588
      %627 = vmatprep.subr.mxu0 0.0
      %628 = vmatpush1.msra.mxu0 %v589
      %629 = vmatprep.subr.mxu0 0.0
      %630 = vmatpush1.msra.mxu0 %v590
      %631 = vmatprep.subr.mxu0 0.0
      %632 = vmatpush1.msra.mxu0 0.0
      %633 = vmatprep.subr.mxu0 0.0
      %634 = vmatpush1.msra.mxu0 0.0
      %635 = vmatprep.subr.mxu0 0.0
      %636 = vmatpush1.msra.mxu0 0.0
      %637 = vmatprep.subr.mxu0 0.0
      %638 = vmatpush1.msra.mxu0 0.0
      %639 = vmatprep.subr.mxu0 0.0
      %640 = vmatpush1.msra.mxu0 0.0
      %641 = vmatprep.subr.mxu0 0.0
      %642 = vmatpush1.msra.mxu0 0.0
      %643 = vmatprep.subr.mxu0 0.0
      %644 = vmatpush1.msra.mxu0 0.0
      %645 = vmatprep.subr.mxu0 0.0
      %646 = vmatpush1.msra.mxu0 0.0
      %647 = vmatprep.subr.mxu0 0.0
      %648 = vmatpush1.msra.mxu0 0.0
      %649 = vmatprep.subr.mxu0 0.0
      %650 = vmatpush1.msra.mxu0 0.0
      %651 = vmatprep.subr.mxu0 0.0
      %652 = vmatpush1.msra.mxu0 0.0
      %653 = vmatprep.subr.mxu0 0.0
      %654 = vmatpush1.msra.mxu0 0.0
      %655 = vmatprep.subr.mxu0 0.0
      %656 = vmatpush1.msra.mxu0 0.0
      %657 = vmatprep.subr.mxu0 0.0
      %658 = vmatpush1.msra.mxu0 0.0
      %659 = vmatprep.subr.mxu0 0.0
      %660 = vmatpush1.msra.mxu0 0.0
      %661 = vmatprep.subr.mxu0 0.0
      %662 = vmatpush1.msra.mxu0 0.0
      %663 = vmatprep.subr.mxu0 0.0
      %664 = vmatpush1.msra.mxu0 0.0
      %665 = vmatprep.subr.mxu0 0.0
      %666 = vmatpush1.msra.mxu0 0.0
      %667 = vmatprep.subr.mxu0 0.0
      %668 = vmatpush1.msra.mxu0 0.0
      %669 = vmatprep.subr.mxu0 0.0
      %670 = vmatpush1.msra.mxu0 0.0
      %671 = vmatprep.subr.mxu0 0.0
      %672 = vmatpush1.msra.mxu0 0.0
      %673 = vmatprep.subr.mxu0 0.0
      %674 = vmatpush1.msra.mxu0 0.0
      %675 = vmatprep.subr.mxu0 0.0
      %676 = vmatpush1.msra.mxu0 0.0
      %677 = vmatprep.subr.mxu0 0.0
      %678 = vmatpush1.msra.mxu0 0.0
      %679 = vmatprep.mubr.f32.mxu0 0.0
      %680 = vmatmul.mubr.f32.gmra.mrb[0].mxu0 %v592
      %v681 = vpop.f32.mrb[0].mxu0
      %v682 = vadd.f32 0.0, %v681
      %v683 = vpop.f32.mrb[0].mxu0
      %684 = vmatprep.mubr.f32.mxu0 0.0
      %685 = vmatmul.mubr.f32.gmra.mrb[0].mxu0 %v595
      %v686 = vpop.f32.mrb[0].mxu0
      %v687 = vadd.f32 0.0, %v686
      %v688 = vpop.f32.mrb[0].mxu0
      %689 = vmatprep.mubr.f32.mxu0 0.0
      %690 = vmatmul.mubr.f32.gmra.mrb[0].mxu0 %v598
      %v691 = vpop.f32.mrb[0].mxu0
      %v692 = vadd.f32 0.0, %v691
      %v693 = vpop.f32.mrb[0].mxu0
      %694 = vmatprep.mubr.f32.mxu0 0.0
      %695 = vmatmul.mubr.f32.gmra.mrb[0].mxu0 %v601
      %v696 = vpop.f32.mrb[0].mxu0
      %v697 = vadd.f32 0.0, %v696
      %v698 = vpop.f32.mrb[0].mxu0
      %699 = vmatprep.mubr.f32.mxu0 0.0
      %700 = vmatmul.mubr.f32.gmra.mrb[0].mxu0 %v604
      %v701 = vpop.f32.mrb[0].mxu0
      %v702 = vadd.f32 0.0, %v701
      %v703 = vpop.f32.mrb[0].mxu0
      %704 = vmatprep.mubr.f32.mxu0 0.0
      %705 = vmatmul.mubr.f32.gmra.mrb[0].mxu0 %v607
      %v706 = vpop.f32.mrb[0].mxu0
      %v707 = vadd.f32 0.0, %v706
      %v708 = vpop.f32.mrb[0].mxu0
      %709 = vmatprep.mubr.f32.mxu0 0.0
      %710 = vmatmul.mubr.f32.gmra.mrb[0].mxu0 %v610
      %v711 = vpop.f32.mrb[0].mxu0
      %v712 = vadd.f32 0.0, %v711
      %v713 = vpop.f32.mrb[0].mxu0
      %714 = vmatprep.mubr.f32.mxu0 0.0
      %715 = vmatmul.mubr.f32.gmra.mrb[0].mxu0 %v613
      %v716 = vpop.f32.mrb[0].mxu0
      %v717 = vadd.f32 0.0, %v716
      %v718 = vpop.f32.mrb[0].mxu0
      %719 = vdwg.mxu0
      %728 = vrot.lane.b32.xlu0 %v682, 64
      %v729 = vpop.permute.xlu0 %728
      %730 = vrot.lane.b32.xlu0 %v687, 64
      %v731 = vpop.permute.xlu0 %730
      %732 = vrot.lane.b32.xlu0 %v692, 64
      %v733 = vpop.permute.xlu0 %732
      %734 = vrot.lane.b32.xlu0 %v697, 64
      %v735 = vpop.permute.xlu0 %734
      %736 = vrot.lane.b32.xlu0 %v702, 64
      %v737 = vpop.permute.xlu0 %736
      %738 = vrot.lane.b32.xlu0 %v707, 64
      %v739 = vpop.permute.xlu0 %738
      %740 = vrot.lane.b32.xlu0 %v712, 64
      %v741 = vpop.permute.xlu0 %740
      %742 = vrot.lane.b32.xlu0 %v717, 64
      %v743 = vpop.permute.xlu0 %742
      %v752 = vadd.f32 %v386, %v729
      %v753 = vadd.f32 %v391, %v731
      %v754 = vadd.f32 %v396, %v733
      %v755 = vadd.f32 %v401, %v735
      %v756 = vadd.f32 %v406, %v737
      %v757 = vadd.f32 %v411, %v739
      %v758 = vadd.f32 %v416, %v741
      %v759 = vadd.f32 %v421, %v743
      %v760 = vld [vmem:[%s6] sm:$0x1]
      %v762 = vlaneseq
      %v763 = vshrl.u32 %v762, 7
      %v764 = vsub.s32 0, %v763
      %v765 = vrot.slane %v760, %v764
      %766 = vrot.lane.b32.xlu0 %v765, 64
      %v767 = vpop.permute.xlu0 %766
      %v769 = vadd.f32 %v752, %v767
      %v770 = vadd.f32 %v753, %v767
      %v771 = vadd.f32 %v754, %v767
      %v772 = vadd.f32 %v755, %v767
      %v773 = vadd.f32 %v756, %v767
      %v774 = vadd.f32 %v757, %v767
      %v775 = vadd.f32 %v758, %v767
      %v776 = vadd.f32 %v759, %v767
      %785 = vrot.lane.b32.xlu0 %v769, 64
      %v786 = vpop.permute.xlu0 %785
      %787 = vrot.lane.b32.xlu0 %v770, 64
      %v788 = vpop.permute.xlu0 %787
      %789 = vrot.lane.b32.xlu0 %v771, 64
      %v790 = vpop.permute.xlu0 %789
      %791 = vrot.lane.b32.xlu0 %v772, 64
      %v792 = vpop.permute.xlu0 %791
      %793 = vrot.lane.b32.xlu0 %v773, 64
      %v794 = vpop.permute.xlu0 %793
      %795 = vrot.lane.b32.xlu0 %v774, 64
      %v796 = vpop.permute.xlu0 %795
      %797 = vrot.lane.b32.xlu0 %v775, 64
      %v798 = vpop.permute.xlu0 %797
      %799 = vrot.lane.b32.xlu0 %v776, 64
      %v800 = vpop.permute.xlu0 %799
      %vm809 = vcmask 490496
      %810 = vst.msk [vmem:[%s280] sm:$0xff] %vm809, %v786
      %811 = vst.msk [vmem:[%s280 + $0x8] sm:$0xff] %vm809, %v788
      %812 = vst.msk [vmem:[%s280 + $0x10] sm:$0xff] %vm809, %v790
      %813 = vst.msk [vmem:[%s280 + $0x18] sm:$0xff] %vm809, %v792
      %814 = vst.msk [vmem:[%s280 + $0x20] sm:$0xff] %vm809, %v794
      %815 = vst.msk [vmem:[%s280 + $0x28] sm:$0xff] %vm809, %v796
      %816 = vst.msk [vmem:[%s280 + $0x30] sm:$0xff] %vm809, %v798
      %817 = vst.msk [vmem:[%s280 + $0x38] sm:$0xff] %vm809, %v800
      %s818 = smul.u32 8, %s18
      %p819 = scmp.lt.s32.totalorder %s818, 15
      %s820 = scalar_select %p819, %s818, 15
      %s821 = smul.addr %s820, 8
      %s822 = scalar_lea.vmem %s7, %s821
      // Predicated region
      $region49: #{decoder_res_cat.1} parent=47 // pred_check
        %p823 = pneg %p188
      $region50: #{decoder_res_cat.1} parent=47 // pred_check_branch
        %825 = sbr.rel (%p823) target = $region52
      $region51: #{decoder_res_cat.1} parent=47 // pred_region
        %s826 = smul.u32 8, %s18
      $region52: #{decoder_res_cat.1} parent=47 // pred_fallthru
        _
    $region48: #{decoder_res_cat.1} parent=5 // pred_fallthru
      _
    %p827 = scmp.le.s32.totalorder 2, %s13
    // Predicated region
    $region53: #{decoder_res_cat.1} parent=5 // pred_check
      %p828 = pneg %p827
    $region54: #{decoder_res_cat.1} parent=5 // pred_check_branch
      %830 = sbr.rel (%p828) target = $region56
    $region55: #{decoder_res_cat.1} parent=5 // pred_region
      %s831 = ssub.s32 %s13, 2
      // Predicated region
      $region57: #{decoder_res_cat.1} parent=55 // pred_check
        %p832 = pneg %p194
      $region58: #{decoder_res_cat.1} parent=55 // pred_check_branch
        %834 = sbr.rel (%p832) target = $region60
      $region59: #{decoder_res_cat.1} parent=55 // pred_region
        %s835 = smul.u32 8, %s19
        %p836 = scmp.lt.s32.totalorder %s835, 15
        %s837 = scalar_select %p836, %s835, 15
        %s838 = smul.addr %s837, 8
        %s839 = scalar_lea.vmem %s7, %s838
      $region60: #{decoder_res_cat.1} parent=55 // pred_fallthru
        _
    $region56: #{decoder_res_cat.1} parent=5 // pred_fallthru
      _
  $region6: #{decoder_res_cat.1} parent=0 // loop_footer
    %s17 = sadd.s32 1, %s13
  $region7: #{decoder_res_cat.1} parent=0 // loop_footer_branch
    %12 = sbr.rel target = $region3
  $region8: #{decoder_res_cat.1} parent=0 // loop_exit
    _

</llo_original>
